<compile_context>
chip_gen: v7x
topology: tpu7x:2x2x1
jax: 0.10.0
libtpu: 0.0.40
codegen_flags: <defaults>
</compile_context>

<pallas_src>
import math

import jax
import jax.numpy as jnp
from jax.experimental import pallas as pl
from jax.experimental.pallas import tpu as pltpu

_LANE = 128          # vreg lane width
_MAX_LANES = 2048    # widest lane-dense row we use


def _copy_kernel(x_ref, o_ref):
    # Elementwise identity copy through VMEM (the only "compute" in squeeze).
    o_ref[...] = x_ref[...]


def _sublane_for(itemsize):
    # Sub-32-bit dtypes pack along sublanes: f32 -> 8, bf16/f16 -> 16,
    # int8/fp8 -> 32.  Wider dtypes still use 8.
    return max(8, 32 // max(1, itemsize))


def _round_up(x, mult):
    return -(-x // mult) * mult


def _vmem_budget():
    """Return (block_budget_bytes, scoped_vmem_limit_bytes), per chip gen."""
    try:
        vmem_bytes = int(pltpu.get_tpu_info().vmem_capacity_bytes)
    except Exception:
        vmem_bytes = 0
    if vmem_bytes >= (100 << 20):   # v5e / v6e: 128 MiB physical VMEM
        return 8 << 20, 64 << 20    # 4 double-buffered blocks = 32 MiB <= 64
    if vmem_bytes > 0:              # v7x: 64 MiB physical VMEM
        return 6 << 20, 28 << 20    # 4 blocks = 24 MiB <= 28
    return 4 << 20, 32 << 20        # unknown backend: conservative defaults


def _lane_dense_view(total, sublane):
    """Pick a 2-D (m, n) view with n a multiple of 128, or None if impossible."""
    if total % _LANE != 0:
        return None
    n = _LANE
    # Widen n while it still divides the element count and a useful number of
    # rows remains for grid tiling.
    while (n * 2 <= _MAX_LANES
           and total % (n * 2) == 0
           and total // (n * 2) >= sublane):
        n *= 2
    return total // n, n


def _pick_tile_m(m, n, itemsize, sublane, block_budget):
    """Row-tile: multiple of the dtype-aware sublane count, under the budget."""
    row_bytes = n * itemsize
    max_rows = max(sublane, (block_budget // row_bytes) // sublane * sublane)
    if m <= max_rows:
        # Whole array fits under budget in one block; still aim for ~4 grid
        # steps so the DMA pipeline overlaps and both v7x TCs share rows.
        target_steps = 4
        tile = _round_up(max(sublane, -(-m // target_steps)), sublane)
        return min(tile, max_rows)
    return max_rows


def _squeeze_impl(x):
    out_shape = tuple(int(d) for d in x.shape if d != 1)
    total = math.prod(x.shape) if x.shape else 1
    itemsize = jnp.dtype(x.dtype).itemsize

    if total == 0:
        # Degenerate empty tensor: pure metadata.
        return x.reshape(out_shape)

    sublane = _sublane_for(itemsize)
    block_budget, vmem_limit = _vmem_budget()
    cparams = pltpu.CompilerParams(
        # TODO(synk): evaluate pltpu.CORE_PARALLEL / pl.core_map on v7x; plain
        # "parallel" is the safe, portable choice here.
        dimension_semantics=("parallel",),
        vmem_limit_bytes=vmem_limit,
    )
    cost = pl.CostEstimate(
        flops=0, transcendentals=0, bytes_accessed=2 * total * itemsize)

    view = _lane_dense_view(total, sublane)
    if view is not None:
        # Main path: lane-dense (m, n) slab, n a multiple of 128 -> unmasked
        # vst; rows tiled with a cdiv grid (masked partial last block).
        m, n = view
        tile_m = _pick_tile_m(m, n, itemsize, sublane, block_budget)
        x2 = x.reshape(m, n)   # zero-compute glue; squeeze itself is metadata
        y2 = pl.pallas_call(
            _copy_kernel,
            out_shape=jax.ShapeDtypeStruct((m, n), x.dtype),
            grid=(pl.cdiv(m, tile_m),),
            in_specs=[pl.BlockSpec((tile_m, n), lambda i: (i, 0))],
            out_specs=pl.BlockSpec((tile_m, n), lambda i: (i, 0)),
            compiler_params=cparams,
            cost_estimate=cost,
        )(x2)
        return y2.reshape(out_shape)

    # Fallback (element count has no factor of 128): single-row lane view,
    # tiled along lanes with a masked tail block.  Bounded VMEM regardless of
    # input size — no whole-array single block.
    tile_n = min(
        max(_LANE, (block_budget // itemsize) // _LANE * _LANE),
        _round_up(total, _LANE),
    )
    x2 = x.reshape(1, total)
    y2 = pl.pallas_call(
        _copy_kernel,
        out_shape=jax.ShapeDtypeStruct((1, total), x.dtype),
        grid=(pl.cdiv(total, tile_n),),
        in_specs=[pl.BlockSpec((1, tile_n), lambda i: (0, i))],
        out_specs=pl.BlockSpec((1, tile_n), lambda i: (0, i)),
        compiler_params=cparams,
        cost_estimate=cost,
    )(x2)
    return y2.reshape(out_shape)


# Shapes are static under jit, so all the Python tiling logic folds away.
squeeze_pallas = jax.jit(_squeeze_impl)


if __name__ == "__main__":
    key = jax.random.PRNGKey(0)

    # Small NCHW input with a size-1 channel dim so squeeze is meaningful:
    # (2, 1, 16, 16) -> (2, 16, 16)
    x = jax.random.normal(key, (2, 1, 16, 16), dtype=jnp.float32)
    y = jax.block_until_ready(squeeze_pallas(x))
    ref = jnp.squeeze(x)
    assert y.shape == ref.shape, (y.shape, ref.shape)
    assert y.dtype == ref.dtype
    assert bool(jnp.array_equal(y, ref))

    # Multiple size-1 dims: (1, 4, 1, 16, 16) -> (4, 16, 16)
    x2 = jax.random.normal(jax.random.PRNGKey(1), (1, 4, 1, 16, 16),
                           dtype=jnp.float32)
    y2 = jax.block_until_ready(squeeze_pallas(x2))
    ref2 = jnp.squeeze(x2)
    assert y2.shape == ref2.shape and bool(jnp.array_equal(y2, ref2))

    # Larger case: lane-dense view + multi-step grid.
    # (4, 1, 512, 512) -> (4, 512, 512)
    x3 = jax.random.normal(jax.random.PRNGKey(2), (4, 1, 512, 512),
                           dtype=jnp.float32)
    y3 = jax.block_until_ready(squeeze_pallas(x3))
    ref3 = jnp.squeeze(x3)
    assert y3.shape == ref3.shape and bool(jnp.array_equal(y3, ref3))

    # Non-divisible row count -> masked partial last block in the main path.
    # (3, 1, 40, 128) -> (3, 40, 128)
    x4 = jax.random.normal(jax.random.PRNGKey(3), (3, 1, 40, 128),
                           dtype=jnp.float32)
    y4 = jax.block_until_ready(squeeze_pallas(x4))
    ref4 = jnp.squeeze(x4)
    assert y4.shape == ref4.shape and bool(jnp.array_equal(y4, ref4))

    # bf16 exercises the dtype-aware (16, 128) sublane tiling.
    x5 = jax.random.normal(jax.random.PRNGKey(4), (2, 1, 64, 128),
                           dtype=jnp.bfloat16)
    y5 = jax.block_until_ready(squeeze_pallas(x5))
    ref5 = jnp.squeeze(x5)
    assert y5.shape == ref5.shape and bool(jnp.array_equal(y5, ref5))

    # Odd element count (no factor of 128) -> bounded lane-tiled fallback.
    # (1, 5, 7) -> (5, 7)
    x6 = jax.random.normal(jax.random.PRNGKey(5), (1, 5, 7), dtype=jnp.float32)
    y6 = jax.block_until_ready(squeeze_pallas(x6))
    ref6 = jnp.squeeze(x6)
    assert y6.shape == ref6.shape and bool(jnp.array_equal(y6, ref6))

    print("KERNEL_OK")
</pallas_src>

<mosaic_0001>
module attributes {stable_mosaic.version = 11 : i64} {
  func.func @_copy_kernel(%arg0: i32, %arg1: memref<8x128xf32, #tpu.memory_space<vmem>>, %arg2: memref<8x128xf32, #tpu.memory_space<vmem>>) attributes {dimension_semantics = [#tpu.dimension_semantics<parallel>], iteration_bounds = array<i64: 1>, scalar_prefetch = 0 : i64, scratch_operands = 0 : i64, tpu.core_type = #tpu.core_type<tc>, window_params = [{transform_indices = @transform_0, window_bounds = array<i64: 8, 128>}, {transform_indices = @transform_1, window_bounds = array<i64: 8, 128>}]} {
    %c0 = arith.constant 0 : index
    %c0_0 = arith.constant 0 : index
    %0 = vector.load %arg1[%c0, %c0_0] : memref<8x128xf32, #tpu.memory_space<vmem>>, vector<8x128xf32>
    %c0_1 = arith.constant 0 : index
    %c0_2 = arith.constant 0 : index
    %1 = vector.load %arg2[%c0_1, %c0_2] : memref<8x128xf32, #tpu.memory_space<vmem>>, vector<8x128xf32>
    tpu.vector_store %arg2[%c0_1, %c0_2], %0 {strides = array<i32>} : memref<8x128xf32, #tpu.memory_space<vmem>>, vector<8x128xf32>,
    return
  }
  func.func @transform_0(%arg0: i32) -> (i32, i32) {
    %c0_i32 = arith.constant 0 : i32
    %c0_i32_0 = arith.constant 0 : i32
    return %arg0, %c0_i32 : i32, i32
  }
  func.func @transform_1(%arg0: i32) -> (i32, i32) {
    %c0_i32 = arith.constant 0 : i32
    %c0_i32_0 = arith.constant 0 : i32
    return %arg0, %c0_i32 : i32, i32
  }
}

</mosaic_0001>

<llo_original>
// kernel: _squeeze_impl.1
$region0: #{_squeeze_impl.1}
  #allocation0 [shape = 'u32[]', space=smem, size = 0x4, offset = 0x4, fixed_abs, tag = 'smem constant byte address 0x4 - core index']
  #allocation1 [shape = 'u32[144,128]{1,0:T(1,128)}', space=vmem, size = 0x12000, scoped, tag = 'internal scratch']
  %s0 = inlined_call_operand.vmem [shape: f32[4,128], index: 0, kind: input, shape index: {}]
  %s1 = inlined_call_operand.vmem [shape: f32[4,128], index: 1, kind: output, shape index: {}]
  %s2 = sld [smem:[#allocation0]]
  $region44: #{_squeeze_impl.1} parent=0
    _
  %s4 = ssub.s32 1, %s2
  %s5 = scalar_select 0, %s4, %s2
  $region1: #{_squeeze_impl.1} parent=0
    #allocation2 [shape = 'u8[4096]{0}', space=vmem, size = 0x1000, scoped, tag = 'output window, operand 0, single buffered']
    // Predicated region
    $region2: #{_squeeze_impl.1} parent=1 // pred_check
      _
    $region3: #{_squeeze_impl.1} parent=1 // pred_check_branch
      %7 = sbr.rel (0) target = $region5
    $region4: #{_squeeze_impl.1} parent=1 // pred_region
      _
    $region5: #{_squeeze_impl.1} parent=1 // pred_fallthru
      _
    %v8 = vld [vmem:[%s0] sm:$0xff]
    %9 = vst [vmem:[#allocation2] sm:$0xff] %v8
    // Predicated region
    $region6: #{_squeeze_impl.1} parent=1 // pred_check
      _
    $region7: #{_squeeze_impl.1} parent=1 // pred_check_branch
      %11 = sbr.rel (0) target = $region9
    $region8: #{_squeeze_impl.1} parent=1 // pred_region
      // Predicated region
      $region10: #{_squeeze_impl.1} parent=8 // pred_check
        _
      $region11: #{_squeeze_impl.1} parent=8 // pred_check_branch
        %13 = sbr.rel (0) target = $region13
      $region12: #{_squeeze_impl.1} parent=8 // pred_region
        // Predicated region
        $region14: #{_squeeze_impl.1} parent=12 // pred_check
          _
        $region15: #{_squeeze_impl.1} parent=12 // pred_check_branch
          %15 = sbr.rel target = $region17
        $region16: #{_squeeze_impl.1} parent=12 // pred_region
          // Predicated region
          $region29: #{_squeeze_impl.1} parent=16 // pred_check
            _
          $region30: #{_squeeze_impl.1} parent=16 // pred_check_branch
            %30 = sbr.rel (0) target = $region32
          $region31: #{_squeeze_impl.1} parent=16 // pred_region
            loop: start=0, step=1, limit=1
            $region33: #{_squeeze_impl.1} parent=31 // loop_pre_header
              _
            $region34: #{_squeeze_impl.1} parent=31 // loop_header
              %s33 = sphi 0, %s37
              %p34 = scmp.ge.s32.totalorder %s33, 1
              %s38 = sphi [#allocation2], [#allocation2]
              %s39 = sphi %s1, %s1
            $region35: #{_squeeze_impl.1} parent=31 // loop_header_branch
              %36 = sbr.rel (%p34) target = $region39
            $region36: #{_squeeze_impl.1} parent=31 // loop_body
              %v40 = vld [vmem:[%s38] sm:$0xf]
              %41 = vst [vmem:[%s39] sm:$0xf] %v40
            $region37: #{_squeeze_impl.1} parent=31 // loop_footer
              %s37 = sadd.s32 1, %s33
            $region38: #{_squeeze_impl.1} parent=31 // loop_footer_branch
              %32 = sbr.rel target = $region34
            $region39: #{_squeeze_impl.1} parent=31 // loop_exit
              _
          $region32: #{_squeeze_impl.1} parent=16 // pred_fallthru
            _
        $region17: #{_squeeze_impl.1} parent=12 // pred_fallthru
          _
        // Predicated region
        $region18: #{_squeeze_impl.1} parent=12 // pred_check
          _
        $region19: #{_squeeze_impl.1} parent=12 // pred_check_branch
          %17 = sbr.rel (0) target = $region21
        $region20: #{_squeeze_impl.1} parent=12 // pred_region
          loop: start=0, step=1, limit=1
          $region22: #{_squeeze_impl.1} parent=20 // loop_pre_header
            _
          $region23: #{_squeeze_impl.1} parent=20 // loop_header
            %s20 = sphi 0, %s24
            %p21 = scmp.ge.s32.totalorder %s20, 1
            %s25 = sphi [#allocation2], [#allocation2]
            %s26 = sphi %s1, %s1
          $region24: #{_squeeze_impl.1} parent=20 // loop_header_branch
            %23 = sbr.rel (%p21) target = $region28
          $region25: #{_squeeze_impl.1} parent=20 // loop_body
            %v27 = vld [vmem:[%s25] sm:$0xf]
            %28 = vst [vmem:[%s26] sm:$0xf] %v27
          $region26: #{_squeeze_impl.1} parent=20 // loop_footer
            %s24 = sadd.s32 1, %s20
          $region27: #{_squeeze_impl.1} parent=20 // loop_footer_branch
            %19 = sbr.rel target = $region23
          $region28: #{_squeeze_impl.1} parent=20 // loop_exit
            _
        $region21: #{_squeeze_impl.1} parent=12 // pred_fallthru
          _
      $region13: #{_squeeze_impl.1} parent=8 // pred_fallthru
        _
      %42 = vnop
    $region9: #{_squeeze_impl.1} parent=1 // pred_fallthru
      _
    // Predicated region
    $region40: #{_squeeze_impl.1} parent=1 // pred_check
      _
    $region41: #{_squeeze_impl.1} parent=1 // pred_check_branch
      %44 = sbr.rel (0) target = $region43
    $region42: #{_squeeze_impl.1} parent=1 // pred_region
      _
    $region43: #{_squeeze_impl.1} parent=1 // pred_fallthru
      _

</llo_original>
